<compile_context>
chip_gen: v5e
topology: v5e:2x2
jax: 0.10.0
libtpu: 0.0.40
codegen_flags: <defaults>
</compile_context>

<pallas_src>
import jax
import jax.numpy as jnp
from jax.experimental import pallas as pl
from jax.experimental.pallas import tpu as pltpu

EPS = 1e-6


def _round_up(x, m):
    return ((x + m - 1) // m) * m


def _kde_kernel(params_ref, test_ref, train_ref, out_ref, acc_ref):
    # params_ref: SMEM (2,) f32 -> [neg_inv_two_var, coef_over_n]
    k = pl.program_id(1)

    @pl.when(k == 0)
    def _init():
        acc_ref[...] = jnp.zeros_like(acc_ref)

    neg_inv_two_var = params_ref[0]

    # (TN, 1) - (1, TM) -> (TN, TM) pairwise differences; test axis on lanes.
    diffs = train_ref[...] - test_ref[...]
    e = jnp.exp((diffs * diffs) * neg_inv_two_var)
    # Reduce over the train (sublane) axis; accumulate raw f32 sums.  Mosaic
    # lowers this to VALU adds across sublane groups + one final XLU reduce.
    acc_ref[...] += jnp.sum(e, axis=0, keepdims=True)

    @pl.when(k == pl.num_programs(1) - 1)
    def _finalize():
        out_ref[...] = acc_ref[...] * params_ref[1]


def estimate_bandwidth_gauss_optimal(train_Xs):
    # 'Gauss-optimal' branch of estimate_bandwidth (sorting does not change std).
    n = train_Xs.shape[0]
    sample_std = jnp.std(train_Xs, ddof=1) + EPS
    return 1.06 * sample_std * (n ** (-0.2))


def kde_forward(test_Xs, train_Xs, *, tm=512, tn=2048):
    """p(x) for each x in test_Xs given train_Xs. Both 1-D arrays -> (M,) f32."""
    test_Xs = test_Xs.astype(jnp.float32)
    train_Xs = train_Xs.astype(jnp.float32)
    M = test_Xs.shape[0]
    N = train_Xs.shape[0]

    bw = estimate_bandwidth_gauss_optimal(train_Xs)
    var = bw * bw
    neg_inv_two_var = -1.0 / (2.0 * var)
    coef_over_n = 1.0 / (jnp.sqrt(2.0 * jnp.pi * var) * N)
    params = jnp.stack([neg_inv_two_var, coef_over_n]).astype(jnp.float32)

    # Tile sizes: TM multiple of 128 (lanes), TN multiple of 8 (sublanes),
    # clamped to the (padded) problem size.
    tm = min(tm, _round_up(M, 128))
    tn = min(tn, _round_up(N, 8))
    m_pad = _round_up(M, tm)
    n_pad = _round_up(N, tn)

    # Lane-dense test row (padded test entries compute garbage, sliced off below).
    test_row = jnp.zeros((1, m_pad), jnp.float32).at[0, :M].set(test_Xs)
    # Train column; pad with +inf so padded kernels contribute exactly exp(-inf)==0.
    train_col = jnp.full((n_pad, 1), jnp.inf, jnp.float32).at[:N, 0].set(train_Xs)

    grid = (m_pad // tm, n_pad // tn)

    out = pl.pallas_call(
        _kde_kernel,
        out_shape=jax.ShapeDtypeStruct((1, m_pad), jnp.float32),
        grid=grid,
        in_specs=[
            pl.BlockSpec(memory_space=pltpu.MemorySpace.SMEM),   # params (whole)
            pl.BlockSpec((1, tm), lambda i, k: (0, i)),          # test tile
            pl.BlockSpec((tn, 1), lambda i, k: (k, 0)),          # train tile
        ],
        out_specs=pl.BlockSpec((1, tm), lambda i, k: (0, i)),
        scratch_shapes=[pltpu.VMEM((1, tm), jnp.float32)],
        compiler_params=pltpu.CompilerParams(
            dimension_semantics=("parallel", "arbitrary"),
            vmem_limit_bytes=64 << 20),
    )(params, test_row, train_col)

    return out[0, :M]


def kde_forward_ref(test_Xs, train_Xs):
    """Pure-JAX reference with identical semantics (for verification)."""
    bw = estimate_bandwidth_gauss_optimal(train_Xs)
    var = bw * bw
    diffs = test_Xs[:, None] - train_Xs[None, :]
    x_sq = diffs ** 2
    coef = 1.0 / jnp.sqrt(2.0 * jnp.pi * var)
    return jnp.mean(coef * jnp.exp(-x_sq / (2.0 * var)), axis=1)


if __name__ == "__main__":
    key = jax.random.PRNGKey(0)
    k1, k2, k3, k4 = jax.random.split(key, 4)

    # Small case matching QRM usage (per-group losses): single grid step.
    train_small = jax.random.normal(k1, (32,), dtype=jnp.float32) * 0.5 + 1.0
    test_small = jax.random.normal(k2, (8,), dtype=jnp.float32) * 0.5 + 1.0
    out_small = jax.block_until_ready(kde_forward(test_small, train_small))
    ref_small = kde_forward_ref(test_small, train_small)
    assert out_small.shape == (8,)
    assert jnp.allclose(out_small, ref_small, rtol=1e-5, atol=1e-5), (out_small, ref_small)

    # Non-aligned sizes with small tiles to exercise the 2-D grid, the
    # output-resident accumulator across the train axis, and +inf train padding.
    train_big = jax.random.normal(k3, (1000,), dtype=jnp.float32) * 2.0
    test_big = jax.random.normal(k4, (300,), dtype=jnp.float32) * 2.0
    out_big = jax.block_until_ready(kde_forward(test_big, train_big, tm=128, tn=256))
    ref_big = kde_forward_ref(test_big, train_big)
    assert out_big.shape == (300,)
    assert jnp.allclose(out_big, ref_big, rtol=1e-5, atol=1e-5), (out_big, ref_big)

    # Default-tile path (single/few grid steps at these sizes, lane-dense stores).
    out_def = jax.block_until_ready(kde_forward(test_big, train_big))
    assert jnp.allclose(out_def, ref_big, rtol=1e-5, atol=1e-5), (out_def, ref_big)

    print("KERNEL_OK")
</pallas_src>

<mosaic_0001>
module attributes {stable_mosaic.version = 11 : i64} {
  func.func @_kde_kernel(%arg0: i32, %arg1: i32, %arg2: memref<2xf32, #tpu.memory_space<smem>>, %arg3: memref<1x128xf32, #tpu.memory_space<vmem>>, %arg4: memref<32x1xf32, #tpu.memory_space<vmem>>, %arg5: memref<1x128xf32, #tpu.memory_space<vmem>>, %arg6: memref<1x128xf32, #tpu.memory_space<vmem>>) attributes {dimension_semantics = [#tpu.dimension_semantics<parallel>, #tpu.dimension_semantics<arbitrary>], iteration_bounds = array<i64: 1, 1>, scalar_prefetch = 0 : i64, scratch_operands = 1 : i64, tpu.core_type = #tpu.core_type<tc>, window_params = [{transform_indices = @transform_0, window_bounds = array<i64: 2>}, {transform_indices = @transform_1, window_bounds = array<i64: 1, 128>}, {transform_indices = @transform_2, window_bounds = array<i64: 32, 1>}, {transform_indices = @transform_3, window_bounds = array<i64: 1, 128>}]} {
    %c0_i32 = arith.constant 0 : i32
    %0 = arith.cmpi eq, %arg1, %c0_i32 : i32
    %1 = arith.extui %0 : i1 to i32
    %c0_i32_0 = arith.constant 0 : i32
    %2 = arith.cmpi ne, %1, %c0_i32_0 : i32
    scf.if %2 {
      %cst_11 = arith.constant 0.000000e+00 : f32
      %21 = vector.broadcast %cst_11 : f32 to vector<1x128xf32>
      %c0_12 = arith.constant 0 : index
      %c0_13 = arith.constant 0 : index
      %22 = vector.load %arg6[%c0_12, %c0_13] : memref<1x128xf32, #tpu.memory_space<vmem>>, vector<1x128xf32>
      tpu.vector_store %arg6[%c0_12, %c0_13], %21 {strides = array<i32>} : memref<1x128xf32, #tpu.memory_space<vmem>>, vector<1x128xf32>,
    } else {
    }
    %c0 = arith.constant 0 : index
    %3 = memref.load %arg2[%c0] : memref<2xf32, #tpu.memory_space<smem>>
    %c0_1 = arith.constant 0 : index
    %c0_2 = arith.constant 0 : index
    %4 = vector.load %arg4[%c0_1, %c0_2] : memref<32x1xf32, #tpu.memory_space<vmem>>, vector<32x1xf32>
    %c0_3 = arith.constant 0 : index
    %c0_4 = arith.constant 0 : index
    %5 = vector.load %arg3[%c0_3, %c0_4] : memref<1x128xf32, #tpu.memory_space<vmem>>, vector<1x128xf32>
    %6 = vector.broadcast %4 : vector<32x1xf32> to vector<32x128xf32>
    %7 = vector.broadcast %5 : vector<1x128xf32> to vector<32x128xf32>
    %8 = arith.subf %6, %7 : vector<32x128xf32>
    %9 = arith.mulf %8, %8 : vector<32x128xf32>
    %10 = vector.broadcast %3 : f32 to vector<32x128xf32>
    %11 = arith.mulf %9, %10 : vector<32x128xf32>
    %12 = math.exp %11 : vector<32x128xf32>
    %c0_5 = arith.constant 0 : index
    %c0_6 = arith.constant 0 : index
    %13 = vector.load %arg6[%c0_5, %c0_6] : memref<1x128xf32, #tpu.memory_space<vmem>>, vector<1x128xf32>
    %cst = arith.constant dense<0.000000e+00> : vector<128xf32>
    %14 = vector.multi_reduction <add>, %12, %cst [0] : vector<32x128xf32> to vector<128xf32>
    %15 = vector.shape_cast %14 : vector<128xf32> to vector<1x128xf32>
    %16 = arith.addf %13, %15 : vector<1x128xf32>
    %c0_7 = arith.constant 0 : index
    %c0_8 = arith.constant 0 : index
    %17 = vector.load %arg6[%c0_7, %c0_8] : memref<1x128xf32, #tpu.memory_space<vmem>>, vector<1x128xf32>
    tpu.vector_store %arg6[%c0_7, %c0_8], %16 {strides = array<i32>} : memref<1x128xf32, #tpu.memory_space<vmem>>, vector<1x128xf32>,
    %c0_i32_9 = arith.constant 0 : i32
    %18 = arith.cmpi eq, %arg1, %c0_i32_9 : i32
    %19 = arith.extui %18 : i1 to i32
    %c0_i32_10 = arith.constant 0 : i32
    %20 = arith.cmpi ne, %19, %c0_i32_10 : i32
    scf.if %20 {
      %c0_11 = arith.constant 0 : index
      %c0_12 = arith.constant 0 : index
      %21 = vector.load %arg6[%c0_11, %c0_12] : memref<1x128xf32, #tpu.memory_space<vmem>>, vector<1x128xf32>
      %c1 = arith.constant 1 : index
      %22 = memref.load %arg2[%c1] : memref<2xf32, #tpu.memory_space<smem>>
      %23 = vector.broadcast %22 : f32 to vector<1x128xf32>
      %24 = arith.mulf %21, %23 : vector<1x128xf32>
      %c0_13 = arith.constant 0 : index
      %c0_14 = arith.constant 0 : index
      %25 = vector.load %arg5[%c0_13, %c0_14] : memref<1x128xf32, #tpu.memory_space<vmem>>, vector<1x128xf32>
      tpu.vector_store %arg5[%c0_13, %c0_14], %24 {strides = array<i32>} : memref<1x128xf32, #tpu.memory_space<vmem>>, vector<1x128xf32>,
    } else {
    }
    return
  }
  func.func @transform_0(%arg0: i32, %arg1: i32) -> i32 {
    %c0_i32 = arith.constant 0 : i32
    %c0_i32_0 = arith.constant 0 : i32
    return %c0_i32 : i32
  }
  func.func @transform_1(%arg0: i32, %arg1: i32) -> (i32, i32) {
    %c0_i32 = arith.constant 0 : i32
    %c0_i32_0 = arith.constant 0 : i32
    return %c0_i32, %arg0 : i32, i32
  }
  func.func @transform_2(%arg0: i32, %arg1: i32) -> (i32, i32) {
    %c0_i32 = arith.constant 0 : i32
    %c0_i32_0 = arith.constant 0 : i32
    return %arg1, %c0_i32 : i32, i32
  }
  func.func @transform_3(%arg0: i32, %arg1: i32) -> (i32, i32) {
    %c0_i32 = arith.constant 0 : i32
    %c0_i32_0 = arith.constant 0 : i32
    return %c0_i32, %arg0 : i32, i32
  }
}

</mosaic_0001>

<llo_original>
// kernel: tpu_custom_call.1
$region0: #{tpu_custom_call.1}
  #allocation0 [shape = 'u32[]', space=smem, size = 0x4, offset = 0x4, fixed_abs, tag = 'smem constant byte address 0x4 - core index']
  #allocation1 [shape = 'u32[72,128]{1,0:T(1,128)}', space=vmem, size = 0x9000, scoped, tag = 'internal scratch']
  #allocation2 [shape = 'f32[1,128]{1,0:T(1,128)}', space=vmem, size = 0x200, scoped, tag = 'scratch operand']
  %s0 = inlined_call_operand.vmem [shape: f32[2], index: 0, kind: input, shape index: {}]
  %s1 = inlined_call_operand.vmem [shape: f32[1,128], index: 1, kind: input, shape index: {}]
  %s2 = inlined_call_operand.vmem [shape: f32[32,1], index: 2, kind: input, shape index: {}]
  %s3 = inlined_call_operand.hbm [shape: f32[1,128], index: 3, kind: output, shape index: {}]
  %s4 = sld [smem:[#allocation0]]
  $region34: #{tpu_custom_call.1} parent=0
    _
  %s6 = ssub.s32 1, %s4
  %s7 = scalar_select 0, %s6, %s4
  $region1: #{tpu_custom_call.1} parent=0
    #allocation3 [shape = 'u8[512]{0}', space=smem, size = 0x200, scoped, tag = 'input window, operand 0, single buffered']
    #allocation4 [shape = 's32[1]{0}', space=sflag, size = 0x4, scoped, tag = 'scoped memory for tpu_custom_call.1']
    #allocation5 [shape = 's32[1]{0}', space=sflag, size = 0x4, scoped, tag = 'scoped memory for tpu_custom_call.1']
    #allocation6 [shape = 'u8[512]{0}', space=vmem, size = 0x400, scoped, tag = 'output window, operand 0, single buffered']
    %8 = vsyncpa [#allocation5], 0
    %9 = vsyncpa [#allocation4], 0
    // Predicated region
    $region2: #{tpu_custom_call.1} parent=1 // pred_check
      _
    $region3: #{tpu_custom_call.1} parent=1 // pred_check_branch
      %11 = sbr.rel (0) target = $region5
    $region4: #{tpu_custom_call.1} parent=1 // pred_region
      %13 = vsyncadd [#allocation5], 0
      %s15 = sshll.u32 %s0, 4
      %s16 = int_to_ptr.vmem [resolvable:$true] %s15
      %18 = dma.vmem_to_smem %s16, 16, [#allocation3], [#allocation5]
    $region5: #{tpu_custom_call.1} parent=1 // pred_fallthru
      _
    // Predicated region
    $region6: #{tpu_custom_call.1} parent=1 // pred_check
      _
    $region7: #{tpu_custom_call.1} parent=1 // pred_check_branch
      %20 = sbr.rel (0) target = $region9
    $region8: #{tpu_custom_call.1} parent=1 // pred_region
      _
    $region9: #{tpu_custom_call.1} parent=1 // pred_fallthru
      _
    // Predicated region
    $region10: #{tpu_custom_call.1} parent=1 // pred_check
      _
    $region11: #{tpu_custom_call.1} parent=1 // pred_check_branch
      %22 = sbr.rel (0) target = $region13
    $region12: #{tpu_custom_call.1} parent=1 // pred_region
      _
    $region13: #{tpu_custom_call.1} parent=1 // pred_fallthru
      _
    // Predicated region
    $region14: #{tpu_custom_call.1} parent=1 // pred_check
      _
    $region15: #{tpu_custom_call.1} parent=1 // pred_check_branch
      %24 = sbr.rel (0) target = $region17
    $region16: #{tpu_custom_call.1} parent=1 // pred_region
      %26 = dma.done [#allocation5], 16
    $region17: #{tpu_custom_call.1} parent=1 // pred_fallthru
      _
    %27 = sfence
    %p28 = scmp.eq.s32.totalorder 0, 0
    // Predicated region
    $region18: #{tpu_custom_call.1} parent=1 // pred_check
      %p29 = pneg %p28
    $region19: #{tpu_custom_call.1} parent=1 // pred_check_branch
      %31 = sbr.rel (%p29) target = $region21
    $region20: #{tpu_custom_call.1} parent=1 // pred_region
      %32 = vst [vmem:[#allocation2] sm:$0x1] 0.0
    $region21: #{tpu_custom_call.1} parent=1 // pred_fallthru
      _
    %s33 = sld [smem:[#allocation3]]
    %v34 = vld [vmem:[%s2] sm:$0xff]
    %v35 = vld [vmem:[%s2 + $0x8] sm:$0xff]
    %v36 = vld [vmem:[%s2 + $0x10] sm:$0xff]
    %v37 = vld [vmem:[%s2 + $0x18] sm:$0xff]
    %v38 = vld [vmem:[%s1] sm:$0x1]
    %40 = vset.pattern.permute.xlu0 0
    %41 = vperm.xlu0 %40, %v34
    %v42 = vpop.permute.xlu0 %41
    %45 = vset.pattern.permute.xlu0 0
    %46 = vperm.xlu0 %45, %v35
    %v47 = vpop.permute.xlu0 %46
    %50 = vset.pattern.permute.xlu0 0
    %51 = vperm.xlu0 %50, %v36
    %v52 = vpop.permute.xlu0 %51
    %55 = vset.pattern.permute.xlu0 0
    %56 = vperm.xlu0 %55, %v37
    %v57 = vpop.permute.xlu0 %56
    %v60 = vperm.slane %v38, 0
    %v62 = vsub.f32 %v42, %v60
    %v63 = vsub.f32 %v47, %v60
    %v64 = vsub.f32 %v52, %v60
    %v65 = vsub.f32 %v57, %v60
    %v66 = vmul.f32 %v62, %v62
    %v67 = vmul.f32 %v63, %v63
    %v68 = vmul.f32 %v64, %v64
    %v69 = vmul.f32 %v65, %v65
    %v70 = vstv %s33
    %v71 = vmul.f32 %v66, %v70
    %v72 = vmul.f32 %v67, %v70
    %v73 = vmul.f32 %v68, %v70
    %v74 = vmul.f32 %v69, %v70
    %v75 = vmul.f32 %v71, 1.442695
    %v76 = vpow.pop %v75
    %v77 = vmul.f32 %v72, 1.442695
    %v78 = vpow.pop %v77
    %v79 = vmul.f32 %v73, 1.442695
    %v80 = vpow.pop %v79
    %v81 = vmul.f32 %v74, 1.442695
    %v82 = vpow.pop %v81
    %v83 = vld [vmem:[#allocation2] sm:$0x1]
    %v84 = vadd.f32 %v76, %v78
    %v85 = vadd.f32 %v84, %v80
    %v86 = vadd.f32 %v85, %v82
    %v87 = vrot.slane %v86, 4
    %v88 = vadd.f32 %v86, %v87
    %v89 = vrot.slane %v88, 2
    %v90 = vadd.f32 %v88, %v89
    %v91 = vrot.slane %v90, 1
    %v92 = vadd.f32 %v90, %v91
    %v93 = vadd.f32 %v83, %v92
    %94 = vst [vmem:[#allocation2] sm:$0x1] %v93
    // Predicated region
    $region22: #{tpu_custom_call.1} parent=1 // pred_check
      %p95 = pneg %p28
    $region23: #{tpu_custom_call.1} parent=1 // pred_check_branch
      %97 = sbr.rel (%p95) target = $region25
    $region24: #{tpu_custom_call.1} parent=1 // pred_region
      %v98 = vld [vmem:[#allocation2] sm:$0x1]
      %s99 = sld [smem:[#allocation3 + $0x1]]
      %v100 = vstv %s99
      %v101 = vmul.f32 %v98, %v100
      %102 = vst [vmem:[#allocation6] sm:$0x1] %v101
    $region25: #{tpu_custom_call.1} parent=1 // pred_fallthru
      _
    // Predicated region
    $region26: #{tpu_custom_call.1} parent=1 // pred_check
      _
    $region27: #{tpu_custom_call.1} parent=1 // pred_check_branch
      %104 = sbr.rel (0) target = $region29
    $region28: #{tpu_custom_call.1} parent=1 // pred_region
      %106 = vsyncadd [#allocation4], 0
      %s108 = sshll.u32 [#allocation6], 4
      %s109 = int_to_ptr.vmem [resolvable:$true] %s108
      %s110 = sshll.u32 %s3, 4
      %s111 = int_to_ptr.hbm [resolvable:$true] %s110
      %113 = dma.vmem_to_hbm [thread:$0]  %s109, 16, %s111, [#allocation4]
    $region29: #{tpu_custom_call.1} parent=1 // pred_fallthru
      _
    // Predicated region
    $region30: #{tpu_custom_call.1} parent=1 // pred_check
      _
    $region31: #{tpu_custom_call.1} parent=1 // pred_check_branch
      %115 = sbr.rel (0) target = $region33
    $region32: #{tpu_custom_call.1} parent=1 // pred_region
      %117 = dma.done [#allocation4], 16
    $region33: #{tpu_custom_call.1} parent=1 // pred_fallthru
      _
    %118 = vsyncpa [#allocation4], 1
    %119 = vsyncpa [#allocation5], 1

</llo_original>
